<compile_context>
chip_gen: v5e
topology: v5e:2x2
jax: 0.10.0
libtpu: 0.0.40
codegen_flags: <defaults>
</compile_context>

<pallas_src>
import functools
import math

import numpy as np
import jax
import jax.numpy as jnp
from jax import lax
from jax.experimental import pallas as pl
from jax.experimental.pallas import tpu as pltpu


def _round_up(a, b):
    return (a + b - 1) // b * b


def temporal_conv_bn(x, weight, bias, gamma, beta, running_mean, running_var,
                     *, kernel_size, stride=1, dilation=1, eps=1e-5,
                     max_lane_tile=512, out_dtype=jnp.bfloat16,
                     activation_dtype=jnp.bfloat16, native_layout=False):
    """Forward of TemporalConv (conv (K,1) over T + inference-mode BatchNorm2d).

    x:       (N, C_in, T, V)  float32
    weight:  (C_out, C_in, K, 1)
    bias, gamma, beta, running_mean, running_var: (C_out,)
    returns: (N, C_out, T_out, V) in out_dtype
             (or (T_out, C_out, N*V) if native_layout=True).
    """
    N, C_in, T, V = x.shape
    C_out = weight.shape[0]
    K = kernel_size
    pad = (K + (K - 1) * (dilation - 1) - 1) // 2
    K_eff = dilation * (K - 1) + 1
    T_out = (T + 2 * pad - dilation * (K - 1) - 1) // stride + 1
    T_pad = T + 2 * pad

    act_bytes = jnp.dtype(activation_dtype).itemsize
    out_bytes = jnp.dtype(out_dtype).itemsize
    sub_x = 32 // act_bytes            # sublane rows per tile (16 for bf16, 8 f32)
    sub_o = 32 // out_bytes

    # Pad C_in so that every time-step slice start (= to*stride*C_in_p rows) is
    # aligned to the sublane tile -> aligned dynamic vector loads.  For realistic
    # branch channel counts (>=16) this adds no padding at all.
    g = sub_x // math.gcd(sub_x, stride)
    C_in_p = _round_up(C_in, g)
    step_rows = stride * C_in_p
    align = step_rows & -step_rows                      # pow2 divisor (>= sub_x)
    Kc = K_eff * C_in_p
    x_rows = T_pad * C_in_p

    # ---------------- lane tiling (target ~8 lane tiles, lane-dense blocks) ----
    NV = N * V
    nv_pad = _round_up(NV, 128)
    target = max(128, _round_up(-(-nv_pad // 8), 128))
    lane_tile = min(max_lane_tile, target)
    nv_pad2 = _round_up(nv_pad, lane_tile)
    nv_steps = nv_pad2 // lane_tile

    # ---------------- per-generation VMEM budget -------------------------------
    try:
        phys_vmem = int(pltpu.get_tpu_info().vmem_capacity_bytes)
    except Exception:
        phys_vmem = 64 * 1024 * 1024                    # conservative (v7x)
    budget = max(32 * 1024 * 1024, int(phys_vmem * 0.8))

    def vmem_need(lane, t_tile):
        x_buf = _round_up(x_rows, sub_x) * lane * act_bytes
        o_buf = t_tile * _round_up(C_out, sub_o) * lane * out_bytes
        w_buf = _round_up(C_out, sub_x) * _round_up(Kc, 128) * act_bytes
        misc = 2 * _round_up(C_out, 8) * 128 * 4
        return 2 * (x_buf + o_buf + w_buf + misc)       # double-buffered blocks

    divisors = [d for d in range(1, T_out + 1) if T_out % d == 0]

    def pick_nt(lane, lane_steps):
        want = 2 if (lane_steps == 1 and T_out > 1) else 1   # keep grid >= 2
        for d in divisors:
            if d >= want and vmem_need(lane, T_out // d) <= budget:
                return d
        return None

    nt = pick_nt(lane_tile, nv_steps)
    while nt is None and lane_tile > 128:
        lane_tile = max(128, lane_tile - 128)
        nv_pad2 = _round_up(nv_pad, lane_tile)
        nv_steps = nv_pad2 // lane_tile
        nt = pick_nt(lane_tile, nv_steps)
    if nt is None:
        # TODO(synk): even the finest time split exceeds the VMEM budget (huge T);
        # a halo-tiled T_out BlockSpec over x would be needed here.
        nt = divisors[-1]
    t_tile = T_out // nt

    vmem_limit = int(min(max(vmem_need(lane_tile, t_tile) * 1.2,
                             32 * 1024 * 1024), phys_vmem))

    # ---------------- host-side prep (single cheap relayout, no im2col) --------
    x_b = x.astype(activation_dtype)
    x_b = jnp.pad(x_b, ((0, 0), (0, C_in_p - C_in), (pad, pad), (0, 0)))
    # (N, C_in_p, T_pad, V) -> (T_pad, C_in_p, N, V) -> (T_pad*C_in_p, N*V)
    x_t = jnp.transpose(x_b, (2, 1, 0, 3)).reshape(T_pad * C_in_p, NV)
    x_t = jnp.pad(x_t, ((0, 0), (0, nv_pad2 - NV)))

    # Weights -> (C_out, K_eff*C_in_p), zeros between taps encode the dilation.
    w_k = jnp.transpose(weight[..., 0], (0, 2, 1)).astype(jnp.float32)  # (C_out,K,C_in)
    w_full = jnp.zeros((C_out, K_eff, C_in_p), jnp.float32)
    w_full = w_full.at[:, ::dilation, :C_in].set(w_k)
    w2 = w_full.reshape(C_out, Kc).astype(activation_dtype)

    # Inference BN: y = conv(x)*scale + shift, shift absorbs the conv bias.
    scale1 = (gamma * lax.rsqrt(running_var + eps)).astype(jnp.float32)
    shift1 = (beta - running_mean * scale1 + bias * scale1).astype(jnp.float32)
    scale2 = scale1.reshape(C_out, 1)
    shift2 = shift1.reshape(C_out, 1)

    # ---------------- Pallas kernel ---------------------------------------------
    def kernel(w_ref, scale_ref, shift_ref, x_ref, o_ref):
        # w_ref:     (C_out, Kc)            bf16  (resident)
        # scale_ref: (C_out, 1)             f32   (resident)
        # shift_ref: (C_out, 1)             f32   (resident)
        # x_ref:     (T_pad*C_in_p, lane)   bf16  (whole padded T resident)
        # o_ref:     (t_tile, C_out, lane)  out_dtype
        w = w_ref[...]
        # Hoisted broadcasts (JAX does not CSE broadcast_in_dim inside the loop).
        scale_b = jnp.broadcast_to(scale_ref[...], (C_out, lane_tile))
        shift_b = jnp.broadcast_to(shift_ref[...], (C_out, lane_tile))
        t_base = pl.program_id(1) * t_tile

        def body(ti, carry):
            start = pl.multiple_of((t_base + ti) * step_rows, align)
            rhs = x_ref[pl.ds(start, Kc), :]                # (Kc, lane) bf16
            acc = jnp.dot(w, rhs, preferred_element_type=jnp.float32)
            o_ref[ti] = (acc * scale_b + shift_b).astype(o_ref.dtype)
            return carry

        lax.fori_loop(0, t_tile, body, 0, unroll=min(t_tile, 4))

    flops = 2 * C_out * Kc * T_out * nv_pad2
    bytes_accessed = (x_rows * nv_pad2 * act_bytes            # x read once
                      + T_out * C_out * nv_pad2 * out_bytes   # y written once
                      + C_out * Kc * act_bytes + 2 * C_out * 4)

    # When N*V fits one lane tile, parallelize the T_out axis instead so both
    # v7x TensorCores get work (x tile is tiny in that regime).
    t_sem = "parallel" if nv_steps == 1 else "arbitrary"

    y = pl.pallas_call(
        kernel,
        out_shape=jax.ShapeDtypeStruct((T_out, C_out, nv_pad2), out_dtype),
        grid_spec=pltpu.PrefetchScalarGridSpec(
            num_scalar_prefetch=0,
            grid=(nv_steps, nt),
            in_specs=[
                pl.BlockSpec((C_out, Kc), lambda j, t: (0, 0)),        # weights
                pl.BlockSpec((C_out, 1), lambda j, t: (0, 0)),         # BN scale
                pl.BlockSpec((C_out, 1), lambda j, t: (0, 0)),         # BN shift
                pl.BlockSpec((x_rows, lane_tile), lambda j, t: (0, j)),  # x tile
            ],
            out_specs=pl.BlockSpec((t_tile, C_out, lane_tile),
                                   lambda j, t: (t, 0, j)),
        ),
        compiler_params=pltpu.CompilerParams(
            dimension_semantics=("parallel", t_sem),
            vmem_limit_bytes=vmem_limit),
        cost_estimate=pl.CostEstimate(flops=flops, transcendentals=0,
                                      bytes_accessed=bytes_accessed),
    )(w2, scale2, shift2, x_t)

    if native_layout:
        return y[:, :, :NV]                     # (T_out, C_out, N*V)
    y = y[:, :, :NV].reshape(T_out, C_out, N, V)
    # TODO(synk): this NCHW transpose is XLA glue (~2x extra output traffic);
    # stacked TemporalConv layers should pass native_layout=True and keep the
    # kernel-native (T_out, C_out, N*V) layout between layers.
    return jnp.transpose(y, (2, 1, 0, 3))       # (N, C_out, T_out, V)


# ------------------------------ reference -------------------------------------
def _reference(x, weight, bias, gamma, beta, running_mean, running_var,
               *, kernel_size, stride, dilation, eps=1e-5):
    pad = (kernel_size + (kernel_size - 1) * (dilation - 1) - 1) // 2
    y = lax.conv_general_dilated(
        x, weight,
        window_strides=(stride, 1),
        padding=[(pad, pad), (0, 0)],
        rhs_dilation=(dilation, 1),
        dimension_numbers=("NCHW", "OIHW", "NCHW"),
        precision=lax.Precision.HIGHEST)
    y = y + bias[None, :, None, None]
    scale = gamma / jnp.sqrt(running_var + eps)
    shift = beta - running_mean * scale
    return y * scale[None, :, None, None] + shift[None, :, None, None]


# --------------------------------- main ----------------------------------------
if __name__ == "__main__":
    key = jax.random.PRNGKey(0)
    k1, k2, k3, k4, k5, k6, k7 = jax.random.split(key, 7)

    # Small shapes consistent with the module's NCHW conv: (N, C_in, T, V)
    N, C_in, T, V = 2, 4, 16, 16
    C_out, K = 8, 5

    x = jax.random.normal(k1, (N, C_in, T, V), dtype=jnp.float32)
    weight = jax.random.normal(k2, (C_out, C_in, K, 1), dtype=jnp.float32) * 0.1
    bias = jax.random.normal(k3, (C_out,), dtype=jnp.float32) * 0.1
    gamma = 1.0 + 0.1 * jax.random.normal(k4, (C_out,), dtype=jnp.float32)
    beta = 0.1 * jax.random.normal(k5, (C_out,), dtype=jnp.float32)
    running_mean = 0.1 * jax.random.normal(k6, (C_out,), dtype=jnp.float32)
    running_var = 0.5 + jnp.abs(jax.random.normal(k7, (C_out,), dtype=jnp.float32))

    # The kernel streams activations and weights as bf16 (native MXU path);
    # compare against the f32 reference evaluated on identically bf16-rounded
    # x and w so the check isolates the kernel's f32-accumulated arithmetic
    # (tap fusion, dilation zero-fill, scale/shift epilogue).
    x_q = x.astype(jnp.bfloat16).astype(jnp.float32)
    w_q = weight.astype(jnp.bfloat16).astype(jnp.float32)

    # Config A: stride=2, dilation=1, f32 output -> tight numerical check.
    fA = jax.jit(functools.partial(temporal_conv_bn, kernel_size=K, stride=2,
                                   dilation=1, out_dtype=jnp.float32))
    outA = jax.block_until_ready(fA(
        x, weight, bias, gamma, beta, running_mean, running_var))
    refA = _reference(x_q, w_q, bias, gamma, beta, running_mean, running_var,
                      kernel_size=K, stride=2, dilation=1)
    np.testing.assert_allclose(np.asarray(outA), np.asarray(refA),
                               rtol=1e-4, atol=1e-4)

    # Config B: stride=1, dilation=2, default bf16 output -> exercises the
    # dilation (zero-filled taps) and bf16-writeback paths (looser tolerance).
    fB = jax.jit(functools.partial(temporal_conv_bn, kernel_size=K, stride=1,
                                   dilation=2))
    outB = jax.block_until_ready(fB(
        x, weight, bias, gamma, beta, running_mean, running_var))
    refB = _reference(x_q, w_q, bias, gamma, beta, running_mean, running_var,
                      kernel_size=K, stride=1, dilation=2)
    np.testing.assert_allclose(np.asarray(outB.astype(jnp.float32)),
                               np.asarray(refB), rtol=2e-2, atol=2e-2)

    print("KERNEL_OK")
</pallas_src>

<mosaic_0001>
module attributes {stable_mosaic.version = 11 : i64} {
  func.func @kernel(%arg0: i32, %arg1: i32, %arg2: memref<8x40xbf16, #tpu.memory_space<vmem>>, %arg3: memref<8x1xf32, #tpu.memory_space<vmem>>, %arg4: memref<8x1xf32, #tpu.memory_space<vmem>>, %arg5: memref<160x128xbf16, #tpu.memory_space<vmem>>, %arg6: memref<4x8x128xf32, #tpu.memory_space<vmem>>) attributes {dimension_semantics = [#tpu.dimension_semantics<parallel>, #tpu.dimension_semantics<parallel>], iteration_bounds = array<i64: 1, 2>, scalar_prefetch = 0 : i64, scratch_operands = 0 : i64, tpu.core_type = #tpu.core_type<tc>, window_params = [{pipeline_mode = #tpu.pipeline_mode<synchronous>, transform_indices = @transform_0, window_bounds = array<i64: 8, 40>}, {pipeline_mode = #tpu.pipeline_mode<synchronous>, transform_indices = @transform_1, window_bounds = array<i64: 8, 1>}, {pipeline_mode = #tpu.pipeline_mode<synchronous>, transform_indices = @transform_2, window_bounds = array<i64: 8, 1>}, {transform_indices = @transform_3, window_bounds = array<i64: 160, 128>}, {transform_indices = @transform_4, window_bounds = array<i64: 4, 8, 128>}]} {
    %c0 = arith.constant 0 : index
    %c0_0 = arith.constant 0 : index
    %0 = vector.load %arg2[%c0, %c0_0] : memref<8x40xbf16, #tpu.memory_space<vmem>>, vector<8x40xbf16>
    %c0_1 = arith.constant 0 : index
    %c0_2 = arith.constant 0 : index
    %1 = vector.load %arg3[%c0_1, %c0_2] : memref<8x1xf32, #tpu.memory_space<vmem>>, vector<8x1xf32>
    %2 = vector.shape_cast %1 : vector<8x1xf32> to vector<8x1xf32>
    %3 = vector.broadcast %2 : vector<8x1xf32> to vector<8x128xf32>
    %c0_3 = arith.constant 0 : index
    %c0_4 = arith.constant 0 : index
    %4 = vector.load %arg4[%c0_3, %c0_4] : memref<8x1xf32, #tpu.memory_space<vmem>>, vector<8x1xf32>
    %5 = vector.shape_cast %4 : vector<8x1xf32> to vector<8x1xf32>
    %6 = vector.broadcast %5 : vector<8x1xf32> to vector<8x128xf32>
    %c4_i32 = arith.constant 4 : i32
    %7 = arith.muli %arg1, %c4_i32 : i32
    %c0_i32 = arith.constant 0 : i32
    %8 = arith.addi %7, %c0_i32 : i32
    %c16_i32 = arith.constant 16 : i32
    %9 = arith.muli %8, %c16_i32 : i32
    %10 = tpu.assume_multiple %9, 16 : i32
    %11 = arith.index_cast %10 : i32 to index
    %c0_5 = arith.constant 0 : index
    %12 = vector.load %arg5[%11, %c0_5] : memref<160x128xbf16, #tpu.memory_space<vmem>>, vector<40x128xbf16>
    %cst = arith.constant dense<0.000000e+00> : vector<8x128xf32>
    %13 = tpu.matmul %0, %12, %cst {dimension_numbers = #tpu.dot_dimension_numbers<[1], [0], [0], [1], [0, 0, 1, 1], [], []>} : vector<8x40xbf16>, vector<40x128xbf16>, vector<8x128xf32> -> vector<8x128xf32>
    %14 = arith.mulf %13, %3 : vector<8x128xf32>
    %15 = arith.addf %14, %6 : vector<8x128xf32>
    %16 = arith.index_cast %c0_i32 : i32 to index
    %c0_6 = arith.constant 0 : index
    %c0_7 = arith.constant 0 : index
    %17 = vector.load %arg6[%16, %c0_6, %c0_7] : memref<4x8x128xf32, #tpu.memory_space<vmem>>, vector<1x8x128xf32>
    %18 = vector.shape_cast %17 : vector<1x8x128xf32> to vector<8x128xf32>
    %19 = vector.shape_cast %15 : vector<8x128xf32> to vector<1x8x128xf32>
    tpu.vector_store %arg6[%16, %c0_6, %c0_7], %19 {strides = array<i32>} : memref<4x8x128xf32, #tpu.memory_space<vmem>>, vector<1x8x128xf32>,
    %c1_i32 = arith.constant 1 : i32
    %20 = arith.addi %7, %c1_i32 : i32
    %c16_i32_8 = arith.constant 16 : i32
    %21 = arith.muli %20, %c16_i32_8 : i32
    %22 = tpu.assume_multiple %21, 16 : i32
    %23 = arith.index_cast %22 : i32 to index
    %c0_9 = arith.constant 0 : index
    %24 = vector.load %arg5[%23, %c0_9] : memref<160x128xbf16, #tpu.memory_space<vmem>>, vector<40x128xbf16>
    %cst_10 = arith.constant dense<0.000000e+00> : vector<8x128xf32>
    %25 = tpu.matmul %0, %24, %cst_10 {dimension_numbers = #tpu.dot_dimension_numbers<[1], [0], [0], [1], [0, 0, 1, 1], [], []>} : vector<8x40xbf16>, vector<40x128xbf16>, vector<8x128xf32> -> vector<8x128xf32>
    %26 = arith.mulf %25, %3 : vector<8x128xf32>
    %27 = arith.addf %26, %6 : vector<8x128xf32>
    %28 = arith.index_cast %c1_i32 : i32 to index
    %c0_11 = arith.constant 0 : index
    %c0_12 = arith.constant 0 : index
    %29 = vector.load %arg6[%28, %c0_11, %c0_12] : memref<4x8x128xf32, #tpu.memory_space<vmem>>, vector<1x8x128xf32>
    %30 = vector.shape_cast %29 : vector<1x8x128xf32> to vector<8x128xf32>
    %31 = vector.shape_cast %27 : vector<8x128xf32> to vector<1x8x128xf32>
    tpu.vector_store %arg6[%28, %c0_11, %c0_12], %31 {strides = array<i32>} : memref<4x8x128xf32, #tpu.memory_space<vmem>>, vector<1x8x128xf32>,
    %c2_i32 = arith.constant 2 : i32
    %32 = arith.addi %7, %c2_i32 : i32
    %c16_i32_13 = arith.constant 16 : i32
    %33 = arith.muli %32, %c16_i32_13 : i32
    %34 = tpu.assume_multiple %33, 16 : i32
    %35 = arith.index_cast %34 : i32 to index
    %c0_14 = arith.constant 0 : index
    %36 = vector.load %arg5[%35, %c0_14] : memref<160x128xbf16, #tpu.memory_space<vmem>>, vector<40x128xbf16>
    %cst_15 = arith.constant dense<0.000000e+00> : vector<8x128xf32>
    %37 = tpu.matmul %0, %36, %cst_15 {dimension_numbers = #tpu.dot_dimension_numbers<[1], [0], [0], [1], [0, 0, 1, 1], [], []>} : vector<8x40xbf16>, vector<40x128xbf16>, vector<8x128xf32> -> vector<8x128xf32>
    %38 = arith.mulf %37, %3 : vector<8x128xf32>
    %39 = arith.addf %38, %6 : vector<8x128xf32>
    %40 = arith.index_cast %c2_i32 : i32 to index
    %c0_16 = arith.constant 0 : index
    %c0_17 = arith.constant 0 : index
    %41 = vector.load %arg6[%40, %c0_16, %c0_17] : memref<4x8x128xf32, #tpu.memory_space<vmem>>, vector<1x8x128xf32>
    %42 = vector.shape_cast %41 : vector<1x8x128xf32> to vector<8x128xf32>
    %43 = vector.shape_cast %39 : vector<8x128xf32> to vector<1x8x128xf32>
    tpu.vector_store %arg6[%40, %c0_16, %c0_17], %43 {strides = array<i32>} : memref<4x8x128xf32, #tpu.memory_space<vmem>>, vector<1x8x128xf32>,
    %c3_i32 = arith.constant 3 : i32
    %44 = arith.addi %7, %c3_i32 : i32
    %c16_i32_18 = arith.constant 16 : i32
    %45 = arith.muli %44, %c16_i32_18 : i32
    %46 = tpu.assume_multiple %45, 16 : i32
    %47 = arith.index_cast %46 : i32 to index
    %c0_19 = arith.constant 0 : index
    %48 = vector.load %arg5[%47, %c0_19] : memref<160x128xbf16, #tpu.memory_space<vmem>>, vector<40x128xbf16>
    %cst_20 = arith.constant dense<0.000000e+00> : vector<8x128xf32>
    %49 = tpu.matmul %0, %48, %cst_20 {dimension_numbers = #tpu.dot_dimension_numbers<[1], [0], [0], [1], [0, 0, 1, 1], [], []>} : vector<8x40xbf16>, vector<40x128xbf16>, vector<8x128xf32> -> vector<8x128xf32>
    %50 = arith.mulf %49, %3 : vector<8x128xf32>
    %51 = arith.addf %50, %6 : vector<8x128xf32>
    %52 = arith.index_cast %c3_i32 : i32 to index
    %c0_21 = arith.constant 0 : index
    %c0_22 = arith.constant 0 : index
    %53 = vector.load %arg6[%52, %c0_21, %c0_22] : memref<4x8x128xf32, #tpu.memory_space<vmem>>, vector<1x8x128xf32>
    %54 = vector.shape_cast %53 : vector<1x8x128xf32> to vector<8x128xf32>
    %55 = vector.shape_cast %51 : vector<8x128xf32> to vector<1x8x128xf32>
    tpu.vector_store %arg6[%52, %c0_21, %c0_22], %55 {strides = array<i32>} : memref<4x8x128xf32, #tpu.memory_space<vmem>>, vector<1x8x128xf32>,
    %c4_i32_23 = arith.constant 4 : i32
    return
  }
  func.func @transform_0(%arg0: i32, %arg1: i32) -> (i32, i32) {
    %c0_i32 = arith.constant 0 : i32
    %c0_i32_0 = arith.constant 0 : i32
    %c0_i32_1 = arith.constant 0 : i32
    return %c0_i32, %c0_i32_0 : i32, i32
  }
  func.func @transform_1(%arg0: i32, %arg1: i32) -> (i32, i32) {
    %c0_i32 = arith.constant 0 : i32
    %c0_i32_0 = arith.constant 0 : i32
    %c0_i32_1 = arith.constant 0 : i32
    return %c0_i32, %c0_i32_0 : i32, i32
  }
  func.func @transform_2(%arg0: i32, %arg1: i32) -> (i32, i32) {
    %c0_i32 = arith.constant 0 : i32
    %c0_i32_0 = arith.constant 0 : i32
    %c0_i32_1 = arith.constant 0 : i32
    return %c0_i32, %c0_i32_0 : i32, i32
  }
  func.func @transform_3(%arg0: i32, %arg1: i32) -> (i32, i32) {
    %c0_i32 = arith.constant 0 : i32
    %c0_i32_0 = arith.constant 0 : i32
    return %c0_i32, %arg0 : i32, i32
  }
  func.func @transform_4(%arg0: i32, %arg1: i32) -> (i32, i32, i32) {
    %c0_i32 = arith.constant 0 : i32
    %c0_i32_0 = arith.constant 0 : i32
    return %arg1, %c0_i32, %arg0 : i32, i32, i32
  }
}

</mosaic_0001>

<llo_original>
// kernel: temporal_conv_bn.1
$region0: #{temporal_conv_bn.1}
  #allocation0 [shape = 'u32[]', space=smem, size = 0x4, offset = 0x4, fixed_abs, tag = 'smem constant byte address 0x4 - core index']
  #allocation1 [shape = 'u32[72,128]{1,0:T(1,128)}', space=vmem, size = 0x9000, scoped, tag = 'internal scratch']
  %s0 = inlined_call_operand.vmem [shape: bf16[8,40], index: 0, kind: input, shape index: {}]
  %s1 = inlined_call_operand.vmem [shape: f32[8,1], index: 1, kind: input, shape index: {}]
  %s2 = inlined_call_operand.vmem [shape: f32[8,1], index: 2, kind: input, shape index: {}]
  %s3 = inlined_call_operand.vmem [shape: bf16[160,128], index: 3, kind: input, shape index: {}]
  %s4 = inlined_call_operand.vmem [shape: f32[8,8,128], index: 4, kind: output, shape index: {}]
  %s5 = sld [smem:[#allocation0]]
  $region49: #{temporal_conv_bn.1} parent=0
    _
  %s7 = ssub.s32 1, %s5
  %s8 = scalar_select 0, %s7, %s5
  loop: start=0, step=1, limit=4
  $region2: #{temporal_conv_bn.1} parent=0 // loop_pre_header
    _
  $region3: #{temporal_conv_bn.1} parent=0 // loop_header
    %s10 = sphi 0, %s14
    %p11 = scmp.ge.s32.totalorder %s10, 4
    %s17 = sphi 0, %s29
    %s18 = sphi 0, %s25
    %s19 = sphi 0, %s17
    %s20 = sphi 0, %s18
    %s21 = sphi 0, %s19
    %s22 = sphi 0, %s20
    %s30 = sphi 0, %s30
    %s32 = sphi 0, %s30
    %s33 = sphi 0, %s32
    %s47 = sphi 0, %s33
    %s51 = sphi 0, %s51
    %s53 = sphi 0, %s51
    %s54 = sphi 0, %s53
    %s68 = sphi 0, %s54
    %s72 = sphi 0, %s72
    %s74 = sphi 0, %s72
    %s75 = sphi 0, %s74
    %s89 = sphi 0, %s75
    %s95 = sphi 0, %s97
    %s98 = sphi 0, %s95
    %s99 = sphi 0, %s98
    %s115 = sphi 0, %s99
    %s123 = sphi 0, %s125
    %s126 = sphi 0, %s123
    %s127 = sphi 0, %s126
    %s143 = sphi 0, %s127
  $region4: #{temporal_conv_bn.1} parent=0 // loop_header_branch
    %13 = sbr.rel (%p11) target = $region8
  $region5: #{temporal_conv_bn.1} parent=0 // loop_body
    %s15 = ssub.s32 %s10, 1
    %s16 = ssub.s32 %s10, 2
    %s23 = sadd.s32 1, %s18
    %p24 = scmp.ge.s32.totalorder %s23, 2
    %s25 = scalar_select %p24, 0, %s23
    %s26 = sadd.s32 1, %s17
    %s27 = scalar_select %p24, %s26, %s17
    %p28 = scmp.ge.s32.totalorder %s27, 1
    %s29 = scalar_select %p28, 0, %s27
    %s31 = sadd.s32 %s30, 1
    %p34 = scmp.eq.s32.totalorder %s10, 1
    %p35 = scmp.ne.s32.totalorder %s30, %s32
    %p36 = scmp.eq.s32.totalorder %s10, 0
    %p37 = por %p35, %p36
    %p38 = scmp.ne.s32.totalorder %s30, %s32
    %p39 = scmp.eq.s32.totalorder %s15, 1
    %p40 = por %p38, %p39
    %p41 = scmp.ne.s32.totalorder %s32, %s33
    %p42 = scmp.eq.s32.totalorder %s15, 0
    %p43 = por %p41, %p42
    %p44 = scmp.ne.s32.totalorder %s32, %s33
    %p45 = scmp.eq.s32.totalorder %s16, 1
    %p46 = por %p44, %p45
    %p48 = scmp.ne.s32.totalorder %s33, %s47
    %p49 = scmp.eq.s32.totalorder %s16, 0
    %p50 = por %p48, %p49
    %s52 = sadd.s32 %s51, 1
    %p55 = scmp.eq.s32.totalorder %s10, 1
    %p56 = scmp.ne.s32.totalorder %s51, %s53
    %p57 = scmp.eq.s32.totalorder %s10, 0
    %p58 = por %p56, %p57
    %p59 = scmp.ne.s32.totalorder %s51, %s53
    %p60 = scmp.eq.s32.totalorder %s15, 1
    %p61 = por %p59, %p60
    %p62 = scmp.ne.s32.totalorder %s53, %s54
    %p63 = scmp.eq.s32.totalorder %s15, 0
    %p64 = por %p62, %p63
    %p65 = scmp.ne.s32.totalorder %s53, %s54
    %p66 = scmp.eq.s32.totalorder %s16, 1
    %p67 = por %p65, %p66
    %p69 = scmp.ne.s32.totalorder %s54, %s68
    %p70 = scmp.eq.s32.totalorder %s16, 0
    %p71 = por %p69, %p70
    %s73 = sadd.s32 %s72, 1
    %p76 = scmp.eq.s32.totalorder %s10, 1
    %p77 = scmp.ne.s32.totalorder %s72, %s74
    %p78 = scmp.eq.s32.totalorder %s10, 0
    %p79 = por %p77, %p78
    %p80 = scmp.ne.s32.totalorder %s72, %s74
    %p81 = scmp.eq.s32.totalorder %s15, 1
    %p82 = por %p80, %p81
    %p83 = scmp.ne.s32.totalorder %s74, %s75
    %p84 = scmp.eq.s32.totalorder %s15, 0
    %p85 = por %p83, %p84
    %p86 = scmp.ne.s32.totalorder %s74, %s75
    %p87 = scmp.eq.s32.totalorder %s16, 1
    %p88 = por %p86, %p87
    %p90 = scmp.ne.s32.totalorder %s75, %s89
    %p91 = scmp.eq.s32.totalorder %s16, 0
    %p92 = por %p90, %p91
    %s93 = ssub.s32 %s17, %s29
    %p94 = scmp.eq.s32.totalorder %s93, 0
    %s96 = sadd.s32 %s95, 1
    %s97 = scalar_select %p94, %s95, %s96
    %p100 = pneg %p94
    %p101 = scmp.eq.s32.totalorder %s10, 1
    %p102 = por %p100, %p101
    %p103 = scmp.ne.s32.totalorder %s95, %s98
    %p104 = scmp.eq.s32.totalorder %s10, 0
    %p105 = por %p103, %p104
    %p106 = scmp.ne.s32.totalorder %s95, %s98
    %p107 = scmp.eq.s32.totalorder %s15, 1
    %p108 = por %p106, %p107
    %p109 = scmp.ne.s32.totalorder %s98, %s99
    %p110 = scmp.eq.s32.totalorder %s15, 0
    %p111 = por %p109, %p110
    %p112 = scmp.ne.s32.totalorder %s98, %s99
    %p113 = scmp.eq.s32.totalorder %s16, 1
    %p114 = por %p112, %p113
    %p116 = scmp.ne.s32.totalorder %s99, %s115
    %p117 = scmp.eq.s32.totalorder %s16, 0
    %p118 = por %p116, %p117
    %s119 = ssub.s32 %s18, %s25
    %s120 = ssub.s32 %s17, %s29
    %s121 = sor.u32 %s119, %s120
    %p122 = scmp.eq.s32.totalorder %s121, 0
    %s124 = sadd.s32 %s123, 1
    %s125 = scalar_select %p122, %s123, %s124
    %p128 = pneg %p122
    %p129 = scmp.eq.s32.totalorder %s10, 1
    %p130 = por %p128, %p129
    %p131 = scmp.ne.s32.totalorder %s123, %s126
    %p132 = scmp.eq.s32.totalorder %s10, 0
    %p133 = por %p131, %p132
    %p134 = scmp.ne.s32.totalorder %s123, %s126
    %p135 = scmp.eq.s32.totalorder %s15, 1
    %p136 = por %p134, %p135
    %p137 = scmp.ne.s32.totalorder %s126, %s127
    %p138 = scmp.eq.s32.totalorder %s15, 0
    %p139 = por %p137, %p138
    %p140 = scmp.ne.s32.totalorder %s126, %s127
    %p141 = scmp.eq.s32.totalorder %s16, 1
    %p142 = por %p140, %p141
    %p144 = scmp.ne.s32.totalorder %s127, %s143
    %p145 = scmp.eq.s32.totalorder %s16, 0
    %p146 = por %p144, %p145
    %p147 = scmp.le.s32.totalorder 1, %s10
    %p148 = scmp.lt.s32.totalorder %s10, 3
    %p149 = pnand %p147, %p148
    %p150 = pneg %p149
    // Predicated region
    $region9: #{temporal_conv_bn.1} parent=5 // pred_check
      _
    $region10: #{temporal_conv_bn.1} parent=5 // pred_check_branch
      %152 = sbr.rel (%p149) target = $region12
    $region11: #{temporal_conv_bn.1} parent=5 // pred_region
      %s153 = ssub.s32 %s10, 1
      // Predicated region
      $region13: #{temporal_conv_bn.1} parent=11 // pred_check
        %p154 = pneg %p43
      $region14: #{temporal_conv_bn.1} parent=11 // pred_check_branch
        %156 = sbr.rel (%p154) target = $region16
      $region15: #{temporal_conv_bn.1} parent=11 // pred_region
        _
      $region16: #{temporal_conv_bn.1} parent=11 // pred_fallthru
        _
      // Predicated region
      $region17: #{temporal_conv_bn.1} parent=11 // pred_check
        %p157 = pneg %p64
      $region18: #{temporal_conv_bn.1} parent=11 // pred_check_branch
        %159 = sbr.rel (%p157) target = $region20
      $region19: #{temporal_conv_bn.1} parent=11 // pred_region
        _
      $region20: #{temporal_conv_bn.1} parent=11 // pred_fallthru
        _
      // Predicated region
      $region21: #{temporal_conv_bn.1} parent=11 // pred_check
        %p160 = pneg %p85
      $region22: #{temporal_conv_bn.1} parent=11 // pred_check_branch
        %162 = sbr.rel (%p160) target = $region24
      $region23: #{temporal_conv_bn.1} parent=11 // pred_region
        _
      $region24: #{temporal_conv_bn.1} parent=11 // pred_fallthru
        _
      // Predicated region
      $region25: #{temporal_conv_bn.1} parent=11 // pred_check
        %p163 = pneg %p111
      $region26: #{temporal_conv_bn.1} parent=11 // pred_check_branch
        %165 = sbr.rel (%p163) target = $region28
      $region27: #{temporal_conv_bn.1} parent=11 // pred_region
        %p166 = scmp.lt.s32.totalorder %s19, 0
        %s167 = scalar_select %p166, %s19, 0
        %s168 = smul.addr %s167, 4
        %s169 = scalar_lea.vmem %s3, %s168
      $region28: #{temporal_conv_bn.1} parent=11 // pred_fallthru
        _
    $region12: #{temporal_conv_bn.1} parent=5 // pred_fallthru
      _
    %p170 = scmp.lt.s32.totalorder %s10, 2
    // Predicated region
    $region29: #{temporal_conv_bn.1} parent=5 // pred_check
      %p171 = pneg %p170
    $region30: #{temporal_conv_bn.1} parent=5 // pred_check_branch
      %173 = sbr.rel (%p171) target = $region32
    $region31: #{temporal_conv_bn.1} parent=5 // pred_region
      _
    $region32: #{temporal_conv_bn.1} parent=5 // pred_fallthru
      _
    %p174 = scmp.le.s32.totalorder 1, %s10
    %p175 = scmp.lt.s32.totalorder %s10, 3
    %p176 = pnand %p174, %p175
    %p177 = pneg %p176
    // Predicated region
    $region33: #{temporal_conv_bn.1} parent=5 // pred_check
      _
    $region34: #{temporal_conv_bn.1} parent=5 // pred_check_branch
      %179 = sbr.rel (%p176) target = $region36
    $region35: #{temporal_conv_bn.1} parent=5 // pred_region
      %s180 = ssub.s32 %s10, 1
      %p181 = pneg %p43
      %p182 = pneg %p40
      %p183 = pneg %p64
      %p184 = pneg %p61
      %p185 = pneg %p85
      %p186 = pneg %p82
      %p187 = scmp.lt.s32.totalorder %s19, 0
      %s188 = scalar_select %p187, %s19, 0
      %s189 = smul.addr %s188, 4
      %s190 = scalar_lea.vmem %s3, %s189
      %p191 = pneg %p111
      %p192 = pneg %p108
      %p193 = pneg %p139
      %p194 = pneg %p136
      %s195 = smul.u32 4, %s20
      %p196 = scmp.lt.s32.totalorder %s195, 7
      %s197 = scalar_select %p196, %s195, 7
      %p198 = scmp.lt.s32.totalorder %s19, 0
      %s199 = scalar_select %p198, %s19, 0
      %s200 = sadd.s32 %s199, %s197
      %s201 = smul.addr %s200, 8
      %s202 = scalar_lea.vmem %s4, %s201
      %p203 = scmp.lt.s32.totalorder %s19, 0
      %s204 = scalar_select %p203, %s19, 0
      %s205 = smul.addr %s204, 4
      %s206 = scalar_lea.vmem %s3, %s205
      %s207 = smul.u32 4, %s20
      %p208 = scmp.lt.s32.totalorder %s207, 7
      %s209 = scalar_select %p208, %s207, 7
      %p210 = scmp.lt.s32.totalorder %s19, 0
      %s211 = scalar_select %p210, %s19, 0
      %s212 = sadd.s32 %s211, %s209
      %s213 = smul.addr %s212, 8
      %s214 = scalar_lea.vmem %s4, %s213
      %s215 = smul.u32 4, %s20
      %v217 = vld [vmem:[%s0] sm:$0xf]
      %v218 = vld [vmem:[%s1] sm:$0xff]
      %220 = vset.pattern.permute.xlu0 0
      %221 = vperm.xlu0 %220, %v218
      %v222 = vpop.permute.xlu0 %221
      %v224 = vld [vmem:[%s2] sm:$0xff]
      %226 = vset.pattern.permute.xlu0 0
      %227 = vperm.xlu0 %226, %v224
      %v228 = vpop.permute.xlu0 %227
      %s230 = smul.u32 %s20, 4
      %s231 = smul.u32 %s20, 64
      %s232 = sshra.s32 %s231, 3
      %s233 = sand.u32 %s231, 7
      %s234 = smul.addr %s232, 4
      %s235 = scalar_lea.vmem %s206, %s234
      %v236 = vld [vmem:[%s235] sm:$0xf]
      %v237 = vld [vmem:[%s235 + $0x4] sm:$0xf]
      %v238 = vld [vmem:[%s235 + $0x8] sm:$0xf]
      %v239 = vld [vmem:[%s235 + $0xc] sm:$0xf]
      %v240 = vld [vmem:[%s235 + $0x10] sm:$0xf]
      %v246 = vunpack.c.l.b16 %v236
      %v247 = vunpack.c.l.b16 %v237
      %v248 = vunpack.c.l.b16 %v238
      %v249 = vunpack.c.l.b16 %v239
      %v250 = vunpack.c.l.b16 %v240
      %v251 = vpack.c.b16 %v247, %v246
      %v252 = vpack.c.b16 %v249, %v248
      %v253 = vpack.c.b16 %v250, %v250
      %vm256 = vcmask 326656
      %v258 = vsel %vm256, %v217, 0
      %vm260 = vcmask 1043456
      %v262 = vsel %vm260, %v253, 0
      %264 = vmatpush.bf16.msra.mxu0 0
      %265 = vmatpush.bf16.msra.mxu0 0
      %266 = vmatpush.bf16.msra.mxu0 0
      %267 = vmatpush.bf16.msra.mxu0 0
      %268 = vmatpush.bf16.msra.mxu0 0
      %269 = vmatpush.bf16.msra.mxu0 %v262
      %270 = vmatpush.bf16.msra.mxu0 %v252
      %271 = vmatpush.bf16.msra.mxu0 %v251
      %272 = vmatmul.bf16.gmra.mxu0 %v258
      %v273 = vpop.f32.mrf.mxu0
      %v274 = vadd.f32 0.0, %v273
      %v275 = vpop.f32.mrf.mxu0
      %276 = vdwg.mxu0
      %v277 = vmul.f32 %v274, %v222
      %v278 = vadd.f32 %v277, %v228
      %279 = vst [vmem:[%s214] sm:$0xff] %v278
      %s280 = sadd.s32 %s230, 1
      %s281 = smul.u32 %s280, 16
      %s282 = sshra.s32 %s281, 3
      %s283 = sand.u32 %s281, 7
      %s284 = smul.addr %s282, 4
      %s285 = scalar_lea.vmem %s206, %s284
      %v286 = vld [vmem:[%s285] sm:$0xf]
      %v287 = vld [vmem:[%s285 + $0x4] sm:$0xf]
      %v288 = vld [vmem:[%s285 + $0x8] sm:$0xf]
      %v289 = vld [vmem:[%s285 + $0xc] sm:$0xf]
      %v290 = vld [vmem:[%s285 + $0x10] sm:$0xf]
      %v296 = vunpack.c.l.b16 %v286
      %v297 = vunpack.c.l.b16 %v287
      %v298 = vunpack.c.l.b16 %v288
      %v299 = vunpack.c.l.b16 %v289
      %v300 = vunpack.c.l.b16 %v290
      %v301 = vpack.c.b16 %v297, %v296
      %v302 = vpack.c.b16 %v299, %v298
      %v303 = vpack.c.b16 %v300, %v300
      %v307 = vsel %vm260, %v303, 0
      %309 = vmatpush.bf16.msra.mxu0 0
      %310 = vmatpush.bf16.msra.mxu0 0
      %311 = vmatpush.bf16.msra.mxu0 0
      %312 = vmatpush.bf16.msra.mxu0 0
      %313 = vmatpush.bf16.msra.mxu0 0
      %314 = vmatpush.bf16.msra.mxu0 %v307
      %315 = vmatpush.bf16.msra.mxu0 %v302
      %316 = vmatpush.bf16.msra.mxu0 %v301
      %317 = vmatmul.bf16.gmra.mxu0 %v258
      %v318 = vpop.f32.mrf.mxu0
      %v319 = vadd.f32 0.0, %v318
      %v320 = vpop.f32.mrf.mxu0
      %321 = vdwg.mxu0
      %v322 = vmul.f32 %v319, %v222
      %v323 = vadd.f32 %v322, %v228
      %s324 = scalar_lea.vmem %s214, 8
      %325 = vst [vmem:[%s324] sm:$0xff] %v323
      %s326 = sadd.s32 %s230, 2
      %s327 = smul.u32 %s326, 16
      %s328 = sshra.s32 %s327, 3
      %s329 = sand.u32 %s327, 7
      %s330 = smul.addr %s328, 4
      %s331 = scalar_lea.vmem %s206, %s330
      %v332 = vld [vmem:[%s331] sm:$0xf]
      %v333 = vld [vmem:[%s331 + $0x4] sm:$0xf]
      %v334 = vld [vmem:[%s331 + $0x8] sm:$0xf]
      %v335 = vld [vmem:[%s331 + $0xc] sm:$0xf]
      %v336 = vld [vmem:[%s331 + $0x10] sm:$0xf]
      %v342 = vunpack.c.l.b16 %v332
      %v343 = vunpack.c.l.b16 %v333
      %v344 = vunpack.c.l.b16 %v334
      %v345 = vunpack.c.l.b16 %v335
      %v346 = vunpack.c.l.b16 %v336
      %v347 = vpack.c.b16 %v343, %v342
      %v348 = vpack.c.b16 %v345, %v344
      %v349 = vpack.c.b16 %v346, %v346
      %v353 = vsel %vm260, %v349, 0
      %355 = vmatpush.bf16.msra.mxu0 0
      %356 = vmatpush.bf16.msra.mxu0 0
      %357 = vmatpush.bf16.msra.mxu0 0
      %358 = vmatpush.bf16.msra.mxu0 0
      %359 = vmatpush.bf16.msra.mxu0 0
      %360 = vmatpush.bf16.msra.mxu0 %v353
      %361 = vmatpush.bf16.msra.mxu0 %v348
      %362 = vmatpush.bf16.msra.mxu0 %v347
      %363 = vmatmul.bf16.gmra.mxu0 %v258
      %v364 = vpop.f32.mrf.mxu0
      %v365 = vadd.f32 0.0, %v364
      %v366 = vpop.f32.mrf.mxu0
      %367 = vdwg.mxu0
      %v368 = vmul.f32 %v365, %v222
      %v369 = vadd.f32 %v368, %v228
      %s370 = scalar_lea.vmem %s214, 16
      %371 = vst [vmem:[%s370] sm:$0xff] %v369
      %s372 = sadd.s32 %s230, 3
      %s373 = smul.u32 %s372, 16
      %s374 = sshra.s32 %s373, 3
      %s375 = sand.u32 %s373, 7
      %s376 = smul.addr %s374, 4
      %s377 = scalar_lea.vmem %s206, %s376
      %v378 = vld [vmem:[%s377] sm:$0xf]
      %v379 = vld [vmem:[%s377 + $0x4] sm:$0xf]
      %v380 = vld [vmem:[%s377 + $0x8] sm:$0xf]
      %v381 = vld [vmem:[%s377 + $0xc] sm:$0xf]
      %v382 = vld [vmem:[%s377 + $0x10] sm:$0xf]
      %v388 = vunpack.c.l.b16 %v378
      %v389 = vunpack.c.l.b16 %v379
      %v390 = vunpack.c.l.b16 %v380
      %v391 = vunpack.c.l.b16 %v381
      %v392 = vunpack.c.l.b16 %v382
      %v393 = vpack.c.b16 %v389, %v388
      %v394 = vpack.c.b16 %v391, %v390
      %v395 = vpack.c.b16 %v392, %v392
      %v399 = vsel %vm260, %v395, 0
      %401 = vmatpush.bf16.msra.mxu0 0
      %402 = vmatpush.bf16.msra.mxu0 0
      %403 = vmatpush.bf16.msra.mxu0 0
      %404 = vmatpush.bf16.msra.mxu0 0
      %405 = vmatpush.bf16.msra.mxu0 0
      %406 = vmatpush.bf16.msra.mxu0 %v399
      %407 = vmatpush.bf16.msra.mxu0 %v394
      %408 = vmatpush.bf16.msra.mxu0 %v393
      %409 = vmatmul.bf16.gmra.mxu0 %v258
      %v410 = vpop.f32.mrf.mxu0
      %v411 = vadd.f32 0.0, %v410
      %v412 = vpop.f32.mrf.mxu0
      %413 = vdwg.mxu0
      %v414 = vmul.f32 %v411, %v222
      %v415 = vadd.f32 %v414, %v228
      %s416 = scalar_lea.vmem %s214, 24
      %417 = vst [vmem:[%s416] sm:$0xff] %v415
      %s418 = smul.u32 4, %s20
      %p419 = scmp.lt.s32.totalorder %s418, 7
      %s420 = scalar_select %p419, %s418, 7
      %p421 = scmp.lt.s32.totalorder %s19, 0
      %s422 = scalar_select %p421, %s19, 0
      %s423 = sadd.s32 %s422, %s420
      %s424 = smul.addr %s423, 8
      %s425 = scalar_lea.vmem %s4, %s424
      // Predicated region
      $region37: #{temporal_conv_bn.1} parent=35 // pred_check
        %p426 = pneg %p136
      $region38: #{temporal_conv_bn.1} parent=35 // pred_check_branch
        %428 = sbr.rel (%p426) target = $region40
      $region39: #{temporal_conv_bn.1} parent=35 // pred_region
        %s429 = smul.u32 4, %s20
      $region40: #{temporal_conv_bn.1} parent=35 // pred_fallthru
        _
    $region36: #{temporal_conv_bn.1} parent=5 // pred_fallthru
      _
    %p430 = scmp.le.s32.totalorder 2, %s10
    // Predicated region
    $region41: #{temporal_conv_bn.1} parent=5 // pred_check
      %p431 = pneg %p430
    $region42: #{temporal_conv_bn.1} parent=5 // pred_check_branch
      %433 = sbr.rel (%p431) target = $region44
    $region43: #{temporal_conv_bn.1} parent=5 // pred_region
      %s434 = ssub.s32 %s10, 2
      // Predicated region
      $region45: #{temporal_conv_bn.1} parent=43 // pred_check
        %p435 = pneg %p142
      $region46: #{temporal_conv_bn.1} parent=43 // pred_check_branch
        %437 = sbr.rel (%p435) target = $region48
      $region47: #{temporal_conv_bn.1} parent=43 // pred_region
        %s438 = smul.u32 4, %s22
        %p439 = scmp.lt.s32.totalorder %s438, 7
        %s440 = scalar_select %p439, %s438, 7
        %p441 = scmp.lt.s32.totalorder %s21, 0
        %s442 = scalar_select %p441, %s21, 0
        %s443 = sadd.s32 %s442, %s440
        %s444 = smul.addr %s443, 8
        %s445 = scalar_lea.vmem %s4, %s444
      $region48: #{temporal_conv_bn.1} parent=43 // pred_fallthru
        _
    $region44: #{temporal_conv_bn.1} parent=5 // pred_fallthru
      _
  $region6: #{temporal_conv_bn.1} parent=0 // loop_footer
    %s14 = sadd.s32 1, %s10
  $region7: #{temporal_conv_bn.1} parent=0 // loop_footer_branch
    %9 = sbr.rel target = $region3
  $region8: #{temporal_conv_bn.1} parent=0 // loop_exit
    _

</llo_original>
